<compile_context>
chip_gen: v7x
topology: tpu7x:2x2x1
jax: 0.10.0
libtpu: 0.0.40
codegen_flags: <defaults>
</compile_context>

<pallas_src>
import math

import jax
import jax.numpy as jnp
from jax.experimental import pallas as pl
from jax.experimental.pallas import tpu as pltpu


def _round_up(x, m):
    return ((x + m - 1) // m) * m


def gcn_kernel_adj_first(x_ref, adj_ref, w_ref, b_ref, o_ref):
    # x_ref:   (N_p, Fin_p)    full node features of current batch
    # adj_ref: (TN, N_p)       row tile of adjacency of current batch
    # w_ref:   (Fin_p, Fout_p) shared across grid
    # b_ref:   (1, Fout_p)     shared across grid
    # o_ref:   (TN, Fout_p)    output row tile
    tmp = jnp.dot(
        adj_ref[...], x_ref[...], preferred_element_type=jnp.float32
    )  # (TN, Fin_p)
    out = jnp.dot(tmp, w_ref[...], preferred_element_type=jnp.float32)
    o_ref[...] = (out + b_ref[...]).astype(o_ref.dtype)


def gcn_kernel_support_first(x_ref, adj_ref, w_ref, b_ref, o_ref, support_ref):
    # support_ref: (N_p, Fout_p) VMEM scratch: x @ W cached per batch.
    # Compute support once per batch (first row tile only), reuse for every
    # adjacency row tile of this batch.
    @pl.when(pl.program_id(1) == 0)
    def _():
        support_ref[...] = jnp.dot(
            x_ref[...], w_ref[...], preferred_element_type=jnp.float32
        )

    out = jnp.dot(
        adj_ref[...], support_ref[...], preferred_element_type=jnp.float32
    )
    o_ref[...] = (out + b_ref[...]).astype(o_ref.dtype)


def graph_convolution(x, adj, weight, bias=None, *, row_tile=256):
    """Fused GCN forward: adj @ (x @ weight) + bias, batched over axis 0."""
    B, N, Fin = x.shape
    Fout = weight.shape[1]

    # Lane-dense feature dims (multiples of 128); sublane-aligned node tiles.
    Fin_p = _round_up(Fin, 128)
    Fout_p = _round_up(Fout, 128)
    TN = row_tile if N >= row_tile else _round_up(N, 8)
    N_p = _round_up(N, TN)
    n_tiles = N_p // TN

    # Zero-padding is semantics-preserving: padded x rows / weight rows-cols
    # contribute zeros, padded adj rows produce rows we trim at the end.
    xp = jnp.pad(x, ((0, 0), (0, N_p - N), (0, Fin_p - Fin)))
    adjp = jnp.pad(adj, ((0, 0), (0, N_p - N), (0, N_p - N)))
    wp = jnp.pad(weight, ((0, Fin_p - Fin), (0, Fout_p - Fout)))
    if bias is None:
        bias = jnp.zeros((Fout,), x.dtype)
    bp = jnp.pad(bias, (0, Fout_p - Fout)).reshape(1, Fout_p)

    # Cheaper matmul ordering (in padded FLOPs):
    #   adj-first:     N^2 * Fin_p + N * Fin_p * Fout_p
    #   support-first: N^2 * Fout_p + N * Fin_p * Fout_p
    adj_first = Fin_p <= Fout_p

    in_specs = [
        pl.BlockSpec((pl.Squeezed(), N_p, Fin_p), lambda b, j: (b, 0, 0)),
        pl.BlockSpec((pl.Squeezed(), TN, N_p), lambda b, j: (b, j, 0)),
        pl.BlockSpec((Fin_p, Fout_p), lambda b, j: (0, 0)),
        pl.BlockSpec((1, Fout_p), lambda b, j: (0, 0)),
    ]
    out_specs = pl.BlockSpec((pl.Squeezed(), TN, Fout_p), lambda b, j: (b, j, 0))

    if adj_first:
        kernel = gcn_kernel_adj_first
        scratch_shapes = []
        dim_sem = ("parallel", "parallel")
        scratch_bytes = 0
    else:
        kernel = gcn_kernel_support_first
        scratch_shapes = [pltpu.VMEM((N_p, Fout_p), jnp.float32)]
        dim_sem = ("parallel", "arbitrary")
        scratch_bytes = 4 * N_p * Fout_p

    # Resident f32 bytes per step (double-buffered inputs/outputs + scratch),
    # bounded so the pipeline budget also fits v7x's 64 MiB VMEM.
    est = 4 * (
        2 * N_p * Fin_p        # x (per-batch, double-buffered)
        + 2 * TN * N_p         # adj row tile
        + 2 * Fin_p * Fout_p   # weight
        + 2 * Fout_p           # bias
        + 2 * TN * Fout_p      # output row tile
    ) + scratch_bytes
    vmem_limit = int(min(64 * 1024 * 1024, max(32 * 1024 * 1024, 2 * est)))

    out_p = pl.pallas_call(
        kernel,
        out_shape=jax.ShapeDtypeStruct((B, N_p, Fout_p), x.dtype),
        grid_spec=pltpu.PrefetchScalarGridSpec(
            num_scalar_prefetch=0,
            grid=(B, n_tiles),
            in_specs=in_specs,
            out_specs=out_specs,
            scratch_shapes=scratch_shapes,
        ),
        compiler_params=pltpu.CompilerParams(
            dimension_semantics=dim_sem,
            vmem_limit_bytes=vmem_limit,
        ),
    )(xp, adjp, wp, bp)

    # Trim padding back to the caller's shapes.
    return out_p[:, :N, :Fout]


def _reference(x, adj, weight, bias):
    return jnp.einsum(
        "bij,bjk->bik", adj, jnp.einsum("bni,io->bno", x, weight)
    ) + bias


if __name__ == "__main__":
    key = jax.random.PRNGKey(0)

    # --- Case 1: small shapes from the module (exercises adj-first path) ---
    B, N = 2, 16
    IN_FEATURES, OUT_FEATURES = 32, 32
    kx, kadj, kw, kb, key = jax.random.split(key, 5)

    # Deterministic parameter init mirroring reset_parameters():
    # uniform(-stdv, stdv) with stdv = 1/sqrt(out_features)
    stdv = 1.0 / math.sqrt(OUT_FEATURES)
    weight = jax.random.uniform(
        kw, (IN_FEATURES, OUT_FEATURES), jnp.float32, minval=-stdv, maxval=stdv
    )
    bias = jax.random.uniform(
        kb, (OUT_FEATURES,), jnp.float32, minval=-stdv, maxval=stdv
    )
    x = jax.random.normal(kx, (B, N, IN_FEATURES), jnp.float32)
    adj_raw = jax.random.uniform(kadj, (B, N, N), jnp.float32)
    adj = adj_raw / jnp.sum(adj_raw, axis=-1, keepdims=True)

    out = jax.block_until_ready(graph_convolution(x, adj, weight, bias))
    ref = _reference(x, adj, weight, bias)
    assert out.shape == (B, N, OUT_FEATURES)
    assert jnp.allclose(out, ref, atol=1e-5, rtol=1e-5)

    # --- Case 2: wide-in / narrow-out (exercises support-first cached path) ---
    IN2, OUT2 = 160, 32
    kx2, kadj2, kw2, kb2, key = jax.random.split(key, 5)
    stdv2 = 1.0 / math.sqrt(OUT2)
    w2 = jax.random.uniform(kw2, (IN2, OUT2), jnp.float32, minval=-stdv2, maxval=stdv2)
    b2 = jax.random.uniform(kb2, (OUT2,), jnp.float32, minval=-stdv2, maxval=stdv2)
    x2 = jax.random.normal(kx2, (B, N, IN2), jnp.float32)
    adj2_raw = jax.random.uniform(kadj2, (B, N, N), jnp.float32)
    adj2 = adj2_raw / jnp.sum(adj2_raw, axis=-1, keepdims=True)

    out2 = jax.block_until_ready(graph_convolution(x2, adj2, w2, b2))
    ref2 = _reference(x2, adj2, w2, b2)
    assert out2.shape == (B, N, OUT2)
    assert jnp.allclose(out2, ref2, atol=1e-5, rtol=1e-5)

    print("KERNEL_OK")
</pallas_src>

<mosaic_0001>
module attributes {stable_mosaic.version = 11 : i64} {
  func.func @gcn_kernel_adj_first(%arg0: i32, %arg1: i32, %arg2: memref<1x16x128xf32, #tpu.memory_space<vmem>>, %arg3: memref<1x16x16xf32, #tpu.memory_space<vmem>>, %arg4: memref<128x128xf32, #tpu.memory_space<vmem>>, %arg5: memref<1x128xf32, #tpu.memory_space<vmem>>, %arg6: memref<1x16x128xf32, #tpu.memory_space<vmem>>) attributes {dimension_semantics = [#tpu.dimension_semantics<parallel>, #tpu.dimension_semantics<parallel>], iteration_bounds = array<i64: 2, 1>, scalar_prefetch = 0 : i64, scratch_operands = 0 : i64, tpu.core_type = #tpu.core_type<tc>, window_params = [{transform_indices = @transform_0, window_bounds = array<i64: 1, 16, 128>}, {transform_indices = @transform_1, window_bounds = array<i64: 1, 16, 16>}, {pipeline_mode = #tpu.pipeline_mode<synchronous>, transform_indices = @transform_2, window_bounds = array<i64: 128, 128>}, {pipeline_mode = #tpu.pipeline_mode<synchronous>, transform_indices = @transform_3, window_bounds = array<i64: 1, 128>}, {transform_indices = @transform_4, window_bounds = array<i64: 1, 16, 128>}]} {
    %c0 = arith.constant 0 : index
    %c0_0 = arith.constant 0 : index
    %c0_1 = arith.constant 0 : index
    %0 = vector.load %arg3[%c0, %c0_0, %c0_1] : memref<1x16x16xf32, #tpu.memory_space<vmem>>, vector<1x16x16xf32>
    %1 = vector.shape_cast %0 : vector<1x16x16xf32> to vector<16x16xf32>
    %c0_2 = arith.constant 0 : index
    %c0_3 = arith.constant 0 : index
    %c0_4 = arith.constant 0 : index
    %2 = vector.load %arg2[%c0_2, %c0_3, %c0_4] : memref<1x16x128xf32, #tpu.memory_space<vmem>>, vector<1x16x128xf32>
    %3 = vector.shape_cast %2 : vector<1x16x128xf32> to vector<16x128xf32>
    %cst = arith.constant dense<0.000000e+00> : vector<16x128xf32>
    %4 = tpu.matmul %1, %3, %cst {dimension_numbers = #tpu.dot_dimension_numbers<[1], [0], [0], [1], [0, 0, 1, 1], [], []>} : vector<16x16xf32>, vector<16x128xf32>, vector<16x128xf32> -> vector<16x128xf32>
    %c0_5 = arith.constant 0 : index
    %c0_6 = arith.constant 0 : index
    %5 = vector.load %arg4[%c0_5, %c0_6] : memref<128x128xf32, #tpu.memory_space<vmem>>, vector<128x128xf32>
    %cst_7 = arith.constant dense<0.000000e+00> : vector<16x128xf32>
    %6 = tpu.matmul %4, %5, %cst_7 {dimension_numbers = #tpu.dot_dimension_numbers<[1], [0], [0], [1], [0, 0, 1, 1], [], []>} : vector<16x128xf32>, vector<128x128xf32>, vector<16x128xf32> -> vector<16x128xf32>
    %c0_8 = arith.constant 0 : index
    %c0_9 = arith.constant 0 : index
    %7 = vector.load %arg5[%c0_8, %c0_9] : memref<1x128xf32, #tpu.memory_space<vmem>>, vector<1x128xf32>
    %8 = vector.broadcast %7 : vector<1x128xf32> to vector<16x128xf32>
    %9 = arith.addf %6, %8 : vector<16x128xf32>
    %c0_10 = arith.constant 0 : index
    %c0_11 = arith.constant 0 : index
    %c0_12 = arith.constant 0 : index
    %10 = vector.load %arg6[%c0_10, %c0_11, %c0_12] : memref<1x16x128xf32, #tpu.memory_space<vmem>>, vector<1x16x128xf32>
    %11 = vector.shape_cast %10 : vector<1x16x128xf32> to vector<16x128xf32>
    %12 = vector.shape_cast %9 : vector<16x128xf32> to vector<1x16x128xf32>
    tpu.vector_store %arg6[%c0_10, %c0_11, %c0_12], %12 {strides = array<i32>} : memref<1x16x128xf32, #tpu.memory_space<vmem>>, vector<1x16x128xf32>,
    return
  }
  func.func @transform_0(%arg0: i32, %arg1: i32) -> (i32, i32, i32) {
    %c0_i32 = arith.constant 0 : i32
    %c0_i32_0 = arith.constant 0 : i32
    %c0_i32_1 = arith.constant 0 : i32
    return %arg0, %c0_i32, %c0_i32_0 : i32, i32, i32
  }
  func.func @transform_1(%arg0: i32, %arg1: i32) -> (i32, i32, i32) {
    %c0_i32 = arith.constant 0 : i32
    %c0_i32_0 = arith.constant 0 : i32
    return %arg0, %arg1, %c0_i32 : i32, i32, i32
  }
  func.func @transform_2(%arg0: i32, %arg1: i32) -> (i32, i32) {
    %c0_i32 = arith.constant 0 : i32
    %c0_i32_0 = arith.constant 0 : i32
    %c0_i32_1 = arith.constant 0 : i32
    return %c0_i32, %c0_i32_0 : i32, i32
  }
  func.func @transform_3(%arg0: i32, %arg1: i32) -> (i32, i32) {
    %c0_i32 = arith.constant 0 : i32
    %c0_i32_0 = arith.constant 0 : i32
    %c0_i32_1 = arith.constant 0 : i32
    return %c0_i32, %c0_i32_0 : i32, i32
  }
  func.func @transform_4(%arg0: i32, %arg1: i32) -> (i32, i32, i32) {
    %c0_i32 = arith.constant 0 : i32
    %c0_i32_0 = arith.constant 0 : i32
    return %arg0, %arg1, %c0_i32 : i32, i32, i32
  }
}

</mosaic_0001>

<llo_original>
// kernel: tpu_custom_call.1
$region0: #{tpu_custom_call.1}
  #allocation0 [shape = 'u32[]', space=smem, size = 0x4, offset = 0x4, fixed_abs, tag = 'smem constant byte address 0x4 - core index']
  #allocation1 [shape = 'u32[144,128]{1,0:T(1,128)}', space=vmem, size = 0x12000, scoped, tag = 'internal scratch']
  %s0 = inlined_call_operand.hbm [shape: f32[2,16,128], index: 0, kind: input, shape index: {}]
  %s1 = inlined_call_operand.hbm [shape: f32[2,16,16], index: 1, kind: input, shape index: {}]
  %s2 = inlined_call_operand.hbm [shape: f32[128,128], index: 2, kind: input, shape index: {}]
  %s3 = inlined_call_operand.vmem [shape: f32[1,128], index: 3, kind: input, shape index: {}]
  %s4 = inlined_call_operand.hbm [shape: f32[2,16,128], index: 4, kind: output, shape index: {}]
  %s5 = sld [smem:[#allocation0]]
  $region61: #{tpu_custom_call.1} parent=0
    _
  %s7 = ssub.s32 1, %s5
  %s8 = scalar_select 0, %s7, %s5
  $region1: #{tpu_custom_call.1} parent=0
    #allocation2 [shape = 'u8[16384]{0}', space=vmem, size = 0x4000, scoped, tag = 'input window, operand 0']
    #allocation3 [shape = 's32[2]{0}', space=sflag, size = 0x8, scoped, tag = 'scoped memory for tpu_custom_call.1']
    #allocation4 [shape = 's32[2]{0}', space=sflag, size = 0x8, scoped, tag = 'scoped memory for tpu_custom_call.1']
    #allocation5 [shape = 'u8[16384]{0}', space=vmem, size = 0x4000, scoped, tag = 'input window, operand 1']
    #allocation6 [shape = 's32[2]{0}', space=sflag, size = 0x8, scoped, tag = 'scoped memory for tpu_custom_call.1']
    #allocation7 [shape = 'u8[65536]{0}', space=vmem, size = 0x10000, scoped, tag = 'input window, operand 2, single buffered']
    #allocation8 [shape = 'u8[16384]{0}', space=vmem, size = 0x4000, scoped, tag = 'output window, operand 0']
    %9 = vsyncpa [#allocation3], 0
    %s10 = scalar_lea.sflag [#allocation3], 1
    %11 = vsyncpa %s10, 0
    %12 = vsyncpa [#allocation6], 0
    %s13 = scalar_lea.sflag [#allocation6], 1
    %14 = vsyncpa %s13, 0
    %15 = vsyncpa [#allocation4], 0
    %s16 = scalar_lea.sflag [#allocation4], 1
    %17 = vsyncpa %s16, 0
    loop: start=0, step=1, limit=4
    $region2: #{tpu_custom_call.1} parent=1 // loop_pre_header
      _
    $region3: #{tpu_custom_call.1} parent=1 // loop_header
      %s19 = sphi 0, %s23
      %p20 = scmp.ge.s32.totalorder %s19, 4
      %s26 = sphi 0, %s38
      %s27 = sphi 0, %s34
      %s28 = sphi 0, %s26
      %s29 = sphi 0, %s27
      %s30 = sphi 0, %s28
      %s31 = sphi 0, %s29
      %s41 = sphi 0, %s43
      %s44 = sphi 0, %s41
      %s45 = sphi 0, %s44
      %s61 = sphi 0, %s45
      %s69 = sphi 0, %s71
      %s72 = sphi 0, %s69
      %s73 = sphi 0, %s72
      %s89 = sphi 0, %s73
      %s93 = sphi 0, %s93
      %s95 = sphi 0, %s93
      %s96 = sphi 0, %s95
      %s110 = sphi 0, %s96
      %s114 = sphi 0, %s114
      %s116 = sphi 0, %s114
      %s117 = sphi 0, %s116
      %s131 = sphi 0, %s117
      %s139 = sphi 0, %s141
      %s142 = sphi 0, %s139
      %s143 = sphi 0, %s142
      %s159 = sphi 0, %s143
    $region4: #{tpu_custom_call.1} parent=1 // loop_header_branch
      %22 = sbr.rel (%p20) target = $region8
    $region5: #{tpu_custom_call.1} parent=1 // loop_body
      %s24 = ssub.s32 %s19, 1
      %s25 = ssub.s32 %s19, 2
      %s32 = sadd.s32 1, %s27
      %p33 = scmp.ge.s32.totalorder %s32, 1
      %s34 = scalar_select %p33, 0, %s32
      %s35 = sadd.s32 1, %s26
      %s36 = scalar_select %p33, %s35, %s26
      %p37 = scmp.ge.s32.totalorder %s36, 2
      %s38 = scalar_select %p37, 0, %s36
      %s39 = ssub.s32 %s26, %s38
      %p40 = scmp.eq.s32.totalorder %s39, 0
      %s42 = sadd.s32 %s41, 1
      %s43 = scalar_select %p40, %s41, %s42
      %p46 = pneg %p40
      %p47 = scmp.eq.s32.totalorder %s19, 1
      %p48 = por %p46, %p47
      %p49 = scmp.ne.s32.totalorder %s41, %s44
      %p50 = scmp.eq.s32.totalorder %s19, 0
      %p51 = por %p49, %p50
      %p52 = scmp.ne.s32.totalorder %s41, %s44
      %p53 = scmp.eq.s32.totalorder %s24, 1
      %p54 = por %p52, %p53
      %p55 = scmp.ne.s32.totalorder %s44, %s45
      %p56 = scmp.eq.s32.totalorder %s24, 0
      %p57 = por %p55, %p56
      %p58 = scmp.ne.s32.totalorder %s44, %s45
      %p59 = scmp.eq.s32.totalorder %s25, 1
      %p60 = por %p58, %p59
      %p62 = scmp.ne.s32.totalorder %s45, %s61
      %p63 = scmp.eq.s32.totalorder %s25, 0
      %p64 = por %p62, %p63
      %s65 = ssub.s32 %s26, %s38
      %s66 = ssub.s32 %s27, %s34
      %s67 = sor.u32 %s65, %s66
      %p68 = scmp.eq.s32.totalorder %s67, 0
      %s70 = sadd.s32 %s69, 1
      %s71 = scalar_select %p68, %s69, %s70
      %p74 = pneg %p68
      %p75 = scmp.eq.s32.totalorder %s19, 1
      %p76 = por %p74, %p75
      %p77 = scmp.ne.s32.totalorder %s69, %s72
      %p78 = scmp.eq.s32.totalorder %s19, 0
      %p79 = por %p77, %p78
      %p80 = scmp.ne.s32.totalorder %s69, %s72
      %p81 = scmp.eq.s32.totalorder %s24, 1
      %p82 = por %p80, %p81
      %p83 = scmp.ne.s32.totalorder %s72, %s73
      %p84 = scmp.eq.s32.totalorder %s24, 0
      %p85 = por %p83, %p84
      %p86 = scmp.ne.s32.totalorder %s72, %s73
      %p87 = scmp.eq.s32.totalorder %s25, 1
      %p88 = por %p86, %p87
      %p90 = scmp.ne.s32.totalorder %s73, %s89
      %p91 = scmp.eq.s32.totalorder %s25, 0
      %p92 = por %p90, %p91
      %s94 = sadd.s32 %s93, 1
      %p97 = scmp.eq.s32.totalorder %s19, 1
      %p98 = scmp.ne.s32.totalorder %s93, %s95
      %p99 = scmp.eq.s32.totalorder %s19, 0
      %p100 = por %p98, %p99
      %p101 = scmp.ne.s32.totalorder %s93, %s95
      %p102 = scmp.eq.s32.totalorder %s24, 1
      %p103 = por %p101, %p102
      %p104 = scmp.ne.s32.totalorder %s95, %s96
      %p105 = scmp.eq.s32.totalorder %s24, 0
      %p106 = por %p104, %p105
      %p107 = scmp.ne.s32.totalorder %s95, %s96
      %p108 = scmp.eq.s32.totalorder %s25, 1
      %p109 = por %p107, %p108
      %p111 = scmp.ne.s32.totalorder %s96, %s110
      %p112 = scmp.eq.s32.totalorder %s25, 0
      %p113 = por %p111, %p112
      %s115 = sadd.s32 %s114, 1
      %p118 = scmp.eq.s32.totalorder %s19, 1
      %p119 = scmp.ne.s32.totalorder %s114, %s116
      %p120 = scmp.eq.s32.totalorder %s19, 0
      %p121 = por %p119, %p120
      %p122 = scmp.ne.s32.totalorder %s114, %s116
      %p123 = scmp.eq.s32.totalorder %s24, 1
      %p124 = por %p122, %p123
      %p125 = scmp.ne.s32.totalorder %s116, %s117
      %p126 = scmp.eq.s32.totalorder %s24, 0
      %p127 = por %p125, %p126
      %p128 = scmp.ne.s32.totalorder %s116, %s117
      %p129 = scmp.eq.s32.totalorder %s25, 1
      %p130 = por %p128, %p129
      %p132 = scmp.ne.s32.totalorder %s117, %s131
      %p133 = scmp.eq.s32.totalorder %s25, 0
      %p134 = por %p132, %p133
      %s135 = ssub.s32 %s26, %s38
      %s136 = ssub.s32 %s27, %s34
      %s137 = sor.u32 %s135, %s136
      %p138 = scmp.eq.s32.totalorder %s137, 0
      %s140 = sadd.s32 %s139, 1
      %s141 = scalar_select %p138, %s139, %s140
      %p144 = pneg %p138
      %p145 = scmp.eq.s32.totalorder %s19, 1
      %p146 = por %p144, %p145
      %p147 = scmp.ne.s32.totalorder %s139, %s142
      %p148 = scmp.eq.s32.totalorder %s19, 0
      %p149 = por %p147, %p148
      %p150 = scmp.ne.s32.totalorder %s139, %s142
      %p151 = scmp.eq.s32.totalorder %s24, 1
      %p152 = por %p150, %p151
      %p153 = scmp.ne.s32.totalorder %s142, %s143
      %p154 = scmp.eq.s32.totalorder %s24, 0
      %p155 = por %p153, %p154
      %p156 = scmp.ne.s32.totalorder %s142, %s143
      %p157 = scmp.eq.s32.totalorder %s25, 1
      %p158 = por %p156, %p157
      %p160 = scmp.ne.s32.totalorder %s143, %s159
      %p161 = scmp.eq.s32.totalorder %s25, 0
      %p162 = por %p160, %p161
      %p163 = scmp.le.s32.totalorder 1, %s19
      %p164 = scmp.lt.s32.totalorder %s19, 3
      %p165 = pnand %p163, %p164
      %p166 = pneg %p165
      // Predicated region
      $region9: #{tpu_custom_call.1} parent=5 // pred_check
        _
      $region10: #{tpu_custom_call.1} parent=5 // pred_check_branch
        %168 = sbr.rel (%p165) target = $region12
      $region11: #{tpu_custom_call.1} parent=5 // pred_region
        %s169 = ssub.s32 %s19, 1
        // Predicated region
        $region13: #{tpu_custom_call.1} parent=11 // pred_check
          %p170 = pneg %p106
        $region14: #{tpu_custom_call.1} parent=11 // pred_check_branch
          %172 = sbr.rel (%p170) target = $region16
        $region15: #{tpu_custom_call.1} parent=11 // pred_region
          %s174 = ssub.s32 2048, 2048
          %175 = vsyncadd [#allocation6], %s174
          %s176 = sshll.u32 [#allocation7], 4
          %s177 = int_to_ptr.vmem [resolvable:$true] %s176
          %182 = dma.hbm_to_vmem [thread:$0]  %s2, 2048, %s177, [#allocation6], 128, 128, 8
        $region16: #{tpu_custom_call.1} parent=11 // pred_fallthru
          _
        // Predicated region
        $region17: #{tpu_custom_call.1} parent=11 // pred_check
          %p183 = pneg %p127
        $region18: #{tpu_custom_call.1} parent=11 // pred_check_branch
          %185 = sbr.rel (%p183) target = $region20
        $region19: #{tpu_custom_call.1} parent=11 // pred_region
          _
        $region20: #{tpu_custom_call.1} parent=11 // pred_fallthru
          _
      $region12: #{tpu_custom_call.1} parent=5 // pred_fallthru
        _
      %p186 = scmp.lt.s32.totalorder %s19, 2
      // Predicated region
      $region21: #{tpu_custom_call.1} parent=5 // pred_check
        %p187 = pneg %p186
      $region22: #{tpu_custom_call.1} parent=5 // pred_check_branch
        %189 = sbr.rel (%p187) target = $region24
      $region23: #{tpu_custom_call.1} parent=5 // pred_region
        // Predicated region
        $region25: #{tpu_custom_call.1} parent=23 // pred_check
          %p190 = pneg %p51
        $region26: #{tpu_custom_call.1} parent=23 // pred_check_branch
          %192 = sbr.rel (%p190) target = $region28
        $region27: #{tpu_custom_call.1} parent=23 // pred_region
          %s193 = sand.u32 %s41, 1
          %s194 = scalar_lea.sflag [#allocation3], %s193
          %s195 = sand.u32 %s41, 1
          %s196 = smul.addr %s195, 16
          %s197 = scalar_lea.vmem [#allocation2], %s196
          %s199 = ssub.s32 256, 256
          %200 = vsyncadd %s194, %s199
          %s201 = smul.addr %s26, 2
          %s202 = smul.addr %s201, 128
          %s203 = scalar_lea.hbm %s0, %s202
          %s204 = sshll.u32 %s197, 4
          %s205 = int_to_ptr.vmem [resolvable:$true] %s204
          %210 = dma.hbm_to_vmem [thread:$0]  %s203, 256, %s205, %s194, 128, 128, 8
        $region28: #{tpu_custom_call.1} parent=23 // pred_fallthru
          _
        // Predicated region
        $region29: #{tpu_custom_call.1} parent=23 // pred_check
          %p211 = pneg %p79
        $region30: #{tpu_custom_call.1} parent=23 // pred_check_branch
          %213 = sbr.rel (%p211) target = $region32
        $region31: #{tpu_custom_call.1} parent=23 // pred_region
          %s214 = sand.u32 %s19, 1
          %s215 = scalar_lea.sflag [#allocation6], %s214
          %s216 = sand.u32 %s69, 1
          %s217 = smul.addr %s216, 16
          %s218 = scalar_lea.vmem [#allocation5], %s217
          %s219 = smul.u32 2, %s27
          %s221 = ssub.s32 256, 256
          %222 = vsyncadd %s215, %s221
          %s223 = smul.addr %s26, 2
          %s224 = sadd.s32 %s219, %s223
          %s225 = smul.addr %s224, 128
          %s226 = scalar_lea.hbm %s1, %s225
          %s227 = sshll.u32 %s218, 4
          %s228 = int_to_ptr.vmem [resolvable:$true] %s227
          %233 = dma.hbm_to_vmem [thread:$0]  %s226, 256, %s228, %s215, 128, 128, 8
        $region32: #{tpu_custom_call.1} parent=23 // pred_fallthru
          _
      $region24: #{tpu_custom_call.1} parent=5 // pred_fallthru
        _
      %p234 = scmp.le.s32.totalorder 1, %s19
      %p235 = scmp.lt.s32.totalorder %s19, 3
      %p236 = pnand %p234, %p235
      %p237 = pneg %p236
      // Predicated region
      $region33: #{tpu_custom_call.1} parent=5 // pred_check
        _
      $region34: #{tpu_custom_call.1} parent=5 // pred_check_branch
        %239 = sbr.rel (%p236) target = $region36
      $region35: #{tpu_custom_call.1} parent=5 // pred_region
        %s240 = ssub.s32 %s19, 1
        %s241 = sand.u32 %s44, 1
        %s242 = scalar_lea.sflag [#allocation3], %s241
        %s243 = sand.u32 %s44, 1
        %s244 = smul.addr %s243, 16
        %s245 = scalar_lea.vmem [#allocation2], %s244
        // Predicated region
        $region37: #{tpu_custom_call.1} parent=35 // pred_check
          %p246 = pneg %p57
        $region38: #{tpu_custom_call.1} parent=35 // pred_check_branch
          %248 = sbr.rel (%p246) target = $region40
        $region39: #{tpu_custom_call.1} parent=35 // pred_region
          %249 = dma.done %s242, 256
        $region40: #{tpu_custom_call.1} parent=35 // pred_fallthru
          _
        %s250 = sand.u32 %s24, 1
        %s251 = scalar_lea.sflag [#allocation6], %s250
        %s252 = sand.u32 %s72, 1
        %s253 = smul.addr %s252, 16
        %s254 = scalar_lea.vmem [#allocation5], %s253
        // Predicated region
        $region41: #{tpu_custom_call.1} parent=35 // pred_check
          %p255 = pneg %p85
        $region42: #{tpu_custom_call.1} parent=35 // pred_check_branch
          %257 = sbr.rel (%p255) target = $region44
        $region43: #{tpu_custom_call.1} parent=35 // pred_region
          %258 = dma.done %s251, 256
        $region44: #{tpu_custom_call.1} parent=35 // pred_fallthru
          _
        // Predicated region
        $region45: #{tpu_custom_call.1} parent=35 // pred_check
          %p259 = pneg %p106
        $region46: #{tpu_custom_call.1} parent=35 // pred_check_branch
          %261 = sbr.rel (%p259) target = $region48
        $region47: #{tpu_custom_call.1} parent=35 // pred_region
          %262 = dma.done [#allocation6], 2048
        $region48: #{tpu_custom_call.1} parent=35 // pred_fallthru
          _
        %s263 = sand.u32 %s44, 1
        %s264 = scalar_lea.sflag [#allocation3], %s263
        %s265 = sand.u32 %s44, 1
        %s266 = smul.addr %s265, 16
        %s267 = scalar_lea.vmem [#allocation2], %s266
        %p268 = pneg %p57
        %p269 = pneg %p54
        %s270 = sand.u32 %s24, 1
        %s271 = scalar_lea.sflag [#allocation6], %s270
        %s272 = sand.u32 %s72, 1
        %s273 = smul.addr %s272, 16
        %s274 = scalar_lea.vmem [#allocation5], %s273
        %p275 = pneg %p85
        %p276 = pneg %p82
        %p277 = pneg %p106
        %p278 = pneg %p103
        %p279 = pneg %p127
        %p280 = pneg %p124
        %p281 = pneg %p155
        %p282 = pneg %p152
        %s283 = sand.u32 %s142, 1
        %s284 = scalar_lea.sflag [#allocation4], %s283
        %s285 = sand.u32 %s142, 1
        %s286 = smul.addr %s285, 16
        %s287 = scalar_lea.vmem [#allocation8], %s286
        %s288 = smul.u32 2, %s29
        %s289 = smul.u32 2, %s29
        %v290 = vld [vmem:[%s254] sm:$0xff]
        %v291 = vld [vmem:[%s254 + $0x8] sm:$0xff]
        %v292 = vld [vmem:[%s245] sm:$0xff]
        %v293 = vld [vmem:[%s245 + $0x8] sm:$0xff]
        %vm294 = vcmask 130048
        %v296 = vsel %vm294, %v290, 0
        %v299 = vsel %vm294, %v291, 0
        %301 = vmatprep.subr.mxu0 0.0
        %302 = vmatpush1.msra.mxu0 %v292
        %303 = vmatprep.subr.mxu0 0.0
        %304 = vmatpush1.msra.mxu0 %v293
        %305 = vmatprep.subr.mxu0 0.0
        %306 = vmatpush1.msra.mxu0 0.0
        %307 = vmatprep.subr.mxu0 0.0
        %308 = vmatpush1.msra.mxu0 0.0
        %309 = vmatprep.subr.mxu0 0.0
        %310 = vmatpush1.msra.mxu0 0.0
        %311 = vmatprep.subr.mxu0 0.0
        %312 = vmatpush1.msra.mxu0 0.0
        %313 = vmatprep.subr.mxu0 0.0
        %314 = vmatpush1.msra.mxu0 0.0
        %315 = vmatprep.subr.mxu0 0.0
        %316 = vmatpush1.msra.mxu0 0.0
        %317 = vmatprep.subr.mxu0 0.0
        %318 = vmatpush1.msra.mxu0 0.0
        %319 = vmatprep.subr.mxu0 0.0
        %320 = vmatpush1.msra.mxu0 0.0
        %321 = vmatprep.subr.mxu0 0.0
        %322 = vmatpush1.msra.mxu0 0.0
        %323 = vmatprep.subr.mxu0 0.0
        %324 = vmatpush1.msra.mxu0 0.0
        %325 = vmatprep.subr.mxu0 0.0
        %326 = vmatpush1.msra.mxu0 0.0
        %327 = vmatprep.subr.mxu0 0.0
        %328 = vmatpush1.msra.mxu0 0.0
        %329 = vmatprep.subr.mxu0 0.0
        %330 = vmatpush1.msra.mxu0 0.0
        %331 = vmatprep.subr.mxu0 0.0
        %332 = vmatpush1.msra.mxu0 0.0
        %333 = vmatprep.subr.mxu0 0.0
        %334 = vmatpush1.msra.mxu0 0.0
        %335 = vmatprep.subr.mxu0 0.0
        %336 = vmatpush1.msra.mxu0 0.0
        %337 = vmatprep.subr.mxu0 0.0
        %338 = vmatpush1.msra.mxu0 0.0
        %339 = vmatprep.subr.mxu0 0.0
        %340 = vmatpush1.msra.mxu0 0.0
        %341 = vmatprep.subr.mxu0 0.0
        %342 = vmatpush1.msra.mxu0 0.0
        %343 = vmatprep.subr.mxu0 0.0
        %344 = vmatpush1.msra.mxu0 0.0
        %345 = vmatprep.subr.mxu0 0.0
        %346 = vmatpush1.msra.mxu0 0.0
        %347 = vmatprep.subr.mxu0 0.0
        %348 = vmatpush1.msra.mxu0 0.0
        %349 = vmatprep.subr.mxu0 0.0
        %350 = vmatpush1.msra.mxu0 0.0
        %351 = vmatprep.subr.mxu0 0.0
        %352 = vmatpush1.msra.mxu0 0.0
        %353 = vmatprep.subr.mxu0 0.0
        %354 = vmatpush1.msra.mxu0 0.0
        %355 = vmatprep.subr.mxu0 0.0
        %356 = vmatpush1.msra.mxu0 0.0
        %357 = vmatprep.subr.mxu0 0.0
        %358 = vmatpush1.msra.mxu0 0.0
        %359 = vmatprep.subr.mxu0 0.0
        %360 = vmatpush1.msra.mxu0 0.0
        %361 = vmatprep.subr.mxu0 0.0
        %362 = vmatpush1.msra.mxu0 0.0
        %363 = vmatprep.subr.mxu0 0.0
        %364 = vmatpush1.msra.mxu0 0.0
        %365 = vmatprep.mubr.f32.mxu0 0.0
        %366 = vmatmul.mubr.f32.gmra.mrb[0].mxu0 %v296
        %v367 = vpop.f32.mrb[0].mxu0
        %v368 = vadd.f32 0.0, %v367
        %v369 = vpop.f32.mrb[0].mxu0
        %370 = vmatprep.mubr.f32.mxu0 0.0
        %371 = vmatmul.mubr.f32.gmra.mrb[0].mxu0 %v299
        %v372 = vpop.f32.mrb[0].mxu0
        %v373 = vadd.f32 0.0, %v372
        %v374 = vpop.f32.mrb[0].mxu0
        %375 = vdwg.mxu0
        %v376 = vld [vmem:[#allocation7] sm:$0xff]
        %v377 = vld [vmem:[#allocation7 + $0x8] sm:$0xff]
        %v378 = vld [vmem:[#allocation7 + $0x10] sm:$0xff]
        %v379 = vld [vmem:[#allocation7 + $0x18] sm:$0xff]
        %v380 = vld [vmem:[#allocation7 + $0x20] sm:$0xff]
        %v381 = vld [vmem:[#allocation7 + $0x28] sm:$0xff]
        %v382 = vld [vmem:[#allocation7 + $0x30] sm:$0xff]
        %v383 = vld [vmem:[#allocation7 + $0x38] sm:$0xff]
        %v384 = vld [vmem:[#allocation7 + $0x40] sm:$0xff]
        %v385 = vld [vmem:[#allocation7 + $0x48] sm:$0xff]
        %v386 = vld [vmem:[#allocation7 + $0x50] sm:$0xff]
        %v387 = vld [vmem:[#allocation7 + $0x58] sm:$0xff]
        %v388 = vld [vmem:[#allocation7 + $0x60] sm:$0xff]
        %v389 = vld [vmem:[#allocation7 + $0x68] sm:$0xff]
        %v390 = vld [vmem:[#allocation7 + $0x70] sm:$0xff]
        %v391 = vld [vmem:[#allocation7 + $0x78] sm:$0xff]
        %v392 = vld [vmem:[%s3] sm:$0x1]
        %v394 = vlaneseq
        %v395 = vshrl.u32 %v394, 7
        %v396 = vsub.s32 0, %v395
        %v397 = vrot.slane %v392, %v396
        %399 = vmatprep.subr.mxu0 0.0
        %400 = vmatpush1.msra.mxu0 %v376
        %401 = vmatprep.subr.mxu0 0.0
        %402 = vmatpush1.msra.mxu0 %v377
        %403 = vmatprep.subr.mxu0 0.0
        %404 = vmatpush1.msra.mxu0 %v378
        %405 = vmatprep.subr.mxu0 0.0
        %406 = vmatpush1.msra.mxu0 %v379
        %407 = vmatprep.subr.mxu0 0.0
        %408 = vmatpush1.msra.mxu0 %v380
        %409 = vmatprep.subr.mxu0 0.0
        %410 = vmatpush1.msra.mxu0 %v381
        %411 = vmatprep.subr.mxu0 0.0
        %412 = vmatpush1.msra.mxu0 %v382
        %413 = vmatprep.subr.mxu0 0.0
        %414 = vmatpush1.msra.mxu0 %v383
        %415 = vmatprep.subr.mxu0 0.0
        %416 = vmatpush1.msra.mxu0 %v384
        %417 = vmatprep.subr.mxu0 0.0
        %418 = vmatpush1.msra.mxu0 %v385
        %419 = vmatprep.subr.mxu0 0.0
        %420 = vmatpush1.msra.mxu0 %v386
        %421 = vmatprep.subr.mxu0 0.0
        %422 = vmatpush1.msra.mxu0 %v387
        %423 = vmatprep.subr.mxu0 0.0
        %424 = vmatpush1.msra.mxu0 %v388
        %425 = vmatprep.subr.mxu0 0.0
        %426 = vmatpush1.msra.mxu0 %v389
        %427 = vmatprep.subr.mxu0 0.0
        %428 = vmatpush1.msra.mxu0 %v390
        %429 = vmatprep.subr.mxu0 0.0
        %430 = vmatpush1.msra.mxu0 %v391
        %431 = vmatprep.subr.mxu0 0.0
        %432 = vmatpush1.msra.mxu0 0.0
        %433 = vmatprep.subr.mxu0 0.0
        %434 = vmatpush1.msra.mxu0 0.0
        %435 = vmatprep.subr.mxu0 0.0
        %436 = vmatpush1.msra.mxu0 0.0
        %437 = vmatprep.subr.mxu0 0.0
        %438 = vmatpush1.msra.mxu0 0.0
        %439 = vmatprep.subr.mxu0 0.0
        %440 = vmatpush1.msra.mxu0 0.0
        %441 = vmatprep.subr.mxu0 0.0
        %442 = vmatpush1.msra.mxu0 0.0
        %443 = vmatprep.subr.mxu0 0.0
        %444 = vmatpush1.msra.mxu0 0.0
        %445 = vmatprep.subr.mxu0 0.0
        %446 = vmatpush1.msra.mxu0 0.0
        %447 = vmatprep.subr.mxu0 0.0
        %448 = vmatpush1.msra.mxu0 0.0
        %449 = vmatprep.subr.mxu0 0.0
        %450 = vmatpush1.msra.mxu0 0.0
        %451 = vmatprep.subr.mxu0 0.0
        %452 = vmatpush1.msra.mxu0 0.0
        %453 = vmatprep.subr.mxu0 0.0
        %454 = vmatpush1.msra.mxu0 0.0
        %455 = vmatprep.subr.mxu0 0.0
        %456 = vmatpush1.msra.mxu0 0.0
        %457 = vmatprep.subr.mxu0 0.0
        %458 = vmatpush1.msra.mxu0 0.0
        %459 = vmatprep.subr.mxu0 0.0
        %460 = vmatpush1.msra.mxu0 0.0
        %461 = vmatprep.subr.mxu0 0.0
        %462 = vmatpush1.msra.mxu0 0.0
        %463 = vmatprep.mubr.f32.mxu0 0.0
        %464 = vmatmul.mubr.f32.gmra.mrb[0].mxu0 %v368
        %v465 = vpop.f32.mrb[0].mxu0
        %v466 = vadd.f32 %v397, %v465
        %v467 = vpop.f32.mrb[0].mxu0
        %468 = vmatprep.mubr.f32.mxu0 0.0
        %469 = vmatmul.mubr.f32.gmra.mrb[0].mxu0 %v373
        %v470 = vpop.f32.mrb[0].mxu0
        %v471 = vadd.f32 %v397, %v470
        %v472 = vpop.f32.mrb[0].mxu0
        %473 = vdwg.mxu0
        %474 = vst [vmem:[%s287] sm:$0xff] %v466
        %475 = vst [vmem:[%s287 + $0x8] sm:$0xff] %v471
        %s476 = sand.u32 %s142, 1
        %s477 = scalar_lea.sflag [#allocation4], %s476
        %s478 = sand.u32 %s142, 1
        %s479 = smul.addr %s478, 16
        %s480 = scalar_lea.vmem [#allocation8], %s479
        // Predicated region
        $region49: #{tpu_custom_call.1} parent=35 // pred_check
          %p481 = pneg %p152
        $region50: #{tpu_custom_call.1} parent=35 // pred_check_branch
          %483 = sbr.rel (%p481) target = $region52
        $region51: #{tpu_custom_call.1} parent=35 // pred_region
          %s484 = smul.u32 2, %s29
          %s486 = ssub.s32 256, 256
          %487 = vsyncadd %s477, %s486
          %s488 = smul.addr %s28, 2
          %s489 = sadd.s32 %s484, %s488
          %s490 = smul.addr %s489, 128
          %s491 = scalar_lea.hbm %s4, %s490
          %s492 = sshll.u32 %s480, 4
          %s493 = int_to_ptr.vmem [resolvable:$true] %s492
          %498 = dma.vmem_to_hbm [thread:$0]  %s493, 256, %s491, %s477, 128, 128, 8
        $region52: #{tpu_custom_call.1} parent=35 // pred_fallthru
          _
      $region36: #{tpu_custom_call.1} parent=5 // pred_fallthru
        _
      %p499 = scmp.le.s32.totalorder 2, %s19
      // Predicated region
      $region53: #{tpu_custom_call.1} parent=5 // pred_check
        %p500 = pneg %p499
      $region54: #{tpu_custom_call.1} parent=5 // pred_check_branch
        %502 = sbr.rel (%p500) target = $region56
      $region55: #{tpu_custom_call.1} parent=5 // pred_region
        %s503 = ssub.s32 %s19, 2
        // Predicated region
        $region57: #{tpu_custom_call.1} parent=55 // pred_check
          %p504 = pneg %p158
        $region58: #{tpu_custom_call.1} parent=55 // pred_check_branch
          %506 = sbr.rel (%p504) target = $region60
        $region59: #{tpu_custom_call.1} parent=55 // pred_region
          %s507 = sand.u32 %s143, 1
          %s508 = scalar_lea.sflag [#allocation4], %s507
          %s509 = sand.u32 %s143, 1
          %s510 = smul.addr %s509, 16
          %s511 = scalar_lea.vmem [#allocation8], %s510
          %512 = dma.done %s508, 256
        $region60: #{tpu_custom_call.1} parent=55 // pred_fallthru
          _
      $region56: #{tpu_custom_call.1} parent=5 // pred_fallthru
        _
    $region6: #{tpu_custom_call.1} parent=1 // loop_footer
      %s23 = sadd.s32 1, %s19
    $region7: #{tpu_custom_call.1} parent=1 // loop_footer_branch
      %18 = sbr.rel target = $region3
    $region8: #{tpu_custom_call.1} parent=1 // loop_exit
      _
    %513 = vsyncpa [#allocation3], 1
    %s514 = scalar_lea.sflag [#allocation3], 1
    %515 = vsyncpa %s514, 1
    %516 = vsyncpa [#allocation6], 1
    %s517 = scalar_lea.sflag [#allocation6], 1
    %518 = vsyncpa %s517, 1
    %519 = vsyncpa [#allocation4], 1
    %s520 = scalar_lea.sflag [#allocation4], 1
    %521 = vsyncpa %s520, 1

</llo_original>
